<compile_context>
chip_gen: v5e
topology: v5e:2x2
jax: 0.10.0
libtpu: 0.0.40
codegen_flags: <defaults>
</compile_context>

<pallas_src>
import math
import numpy as np
import jax
import jax.numpy as jnp
from jax.experimental import pallas as pl
from jax.experimental.pallas import tpu as pltpu

WINDOW_SIZE = 11
SIGMA = 1.5
FIVE = 5  # x1, x2, x1*x1, x2*x2, x1*x2


def _gaussian_1d(ws, sigma):
    # identical construction to torch's gaussian()
    g = np.array(
        [math.exp(-((x - ws // 2) ** 2) / float(2 * sigma ** 2)) for x in range(ws)],
        dtype=np.float64,
    )
    return g / g.sum()


def _gaussian_window_2d(ws, sigma):
    g = _gaussian_1d(ws, sigma)
    return np.outer(g, g)  # (ws, ws), sums to 1


def _mxu_lane_target():
    """Generation-aware lane packing: 256-wide MXU on v6e/v7x, else 128."""
    try:
        kind = jax.devices()[0].device_kind.lower()
    except Exception:
        return 128
    if ("v6" in kind) or ("v7" in kind) or ("7x" in kind):
        return 256
    return 128


def _make_ssim_kernel(NB, Ho, Ho_pad, LWo_pad):
    """One grid step = NB plane-groups, each NT planes packed along lanes."""

    def kernel(c_ref, ah5_ref, awbd_ref, x1_ref, x2_ref, out_ref):
        C1 = c_ref[0]
        C2 = c_ref[1]
        ah5 = ah5_ref[...]     # (FIVE*Ho_pad, FIVE*H)  fused row-pass band
        awbd = awbd_ref[...]   # (LW, LWo_pad)          block-diag col-pass band

        # 0/1 mask removing the Ho->Ho_pad padding rows (those rows of the
        # ssim map evaluate to exactly 1.0 and must not enter the sum).
        rows = jax.lax.broadcasted_iota(jnp.int32, (Ho_pad, LWo_pad), 0)
        row_mask = (rows < Ho).astype(jnp.float32)

        partials = []
        for nb in range(NB):   # static unroll: NB plane-groups per grid step
            x1 = x1_ref[nb]    # (H, LW) - NT planes packed along the lane axis
            x2 = x2_ref[nb]
            # All 5 planes stacked along sublanes -> one row pass + one col pass.
            p5 = jnp.concatenate([x1, x2, x1 * x1, x2 * x2, x1 * x2], axis=0)
            r = jnp.dot(ah5, p5, preferred_element_type=jnp.float32)   # (5*Ho_pad, LW)
            c = jnp.dot(r, awbd, preferred_element_type=jnp.float32)   # (5*Ho_pad, LWo_pad)

            # Ho_pad is a multiple of 8, so these slices are sublane-aligned.
            mu1 = c[0 * Ho_pad:1 * Ho_pad, :]
            mu2 = c[1 * Ho_pad:2 * Ho_pad, :]
            s11 = c[2 * Ho_pad:3 * Ho_pad, :]
            s22 = c[3 * Ho_pad:4 * Ho_pad, :]
            s12 = c[4 * Ho_pad:5 * Ho_pad, :]

            mu1_sq = mu1 * mu1
            mu2_sq = mu2 * mu2
            mu1_mu2 = mu1 * mu2
            sigma1_sq = s11 - mu1_sq
            sigma2_sq = s22 - mu2_sq
            sigma12 = s12 - mu1_mu2

            v1 = 2.0 * sigma12 + C2
            v2 = sigma1_sq + sigma2_sq + C2
            num = (2.0 * mu1_mu2 + C1) * v1
            den = (mu1_sq + mu2_sq + C1) * v2
            # TODO(synk): default (reduced-precision) f32 MXU passes + approx
            # reciprocal; both covered by the 2e-3 tolerance vs float64 ref.
            ssim_map = num * pl.reciprocal(den, approx=True)

            partials.append(jnp.sum(ssim_map * row_mask, axis=0, keepdims=True))

        out_ref[...] = partials[0] if NB == 1 else jnp.concatenate(partials, axis=0)

    return kernel


def _pallas_ssim_core(img1, img2, c1, c2):
    B, D1, D2, D3, D4 = img1.shape
    H, W = D3, D1 * D4
    WS = WINDOW_SIZE
    # TODO(synk): torch shrinks the window when min(H, W) < 11; not implemented.
    assert H >= WS and W >= WS, "SSIM kernel requires H, W >= 11"
    Ho, Wo = H - WS + 1, W - WS + 1
    Ho_pad = ((Ho + 7) // 8) * 8
    N = B * D2                                     # number of (H, W) planes

    # --- generation-aware lane packing --------------------------------------
    lane_target = _mxu_lane_target()               # 128 (v5e) / 256 (v6e, v7x)
    NT = max(1, min(lane_target // W, N))          # LW <= MXU width, no fake planes
    LW, LWo = NT * W, NT * Wo
    LWo_pad = ((LWo + 127) // 128) * 128           # lane-dense output slab

    # --- batch NB plane-groups per grid step ---------------------------------
    G = math.ceil(N / NT)
    group_bytes = H * LW * 4
    NB = max(1, min(
        math.ceil((512 * 1024) / group_bytes),     # >= ~512 KiB input blocks
        max(1, (4 * 1024 * 1024) // group_bytes),  # <= ~4 MiB/block (VMEM headroom)
        64,                                        # bound kernel unroll size
        G))
    if G >= 2:
        NB = min(NB, math.ceil(G / 2))             # keep >= 2 grid steps (v7x 2 TCs)
    G2 = math.ceil(G / NB)
    N_pad = G2 * NB * NT

    def pack(x):
        # torch forward(): permute(0,2,3,1,4)+reshape -> NCHW planes; the
        # trailing reshape merges contiguous axes, so this is one copy.
        x = jnp.transpose(x, (0, 2, 3, 1, 4)).astype(jnp.float32).reshape(N, H, W)
        if N_pad != N:
            x = jnp.pad(x, ((0, N_pad - N), (0, 0), (0, 0)))
        # Pack NT planes along lanes, NB groups per grid step (second copy;
        # pad + reshape + transpose fuse into a single XLA copy fusion).
        # TODO(synk): allow_input_fusion could fold this producer into the
        # pallas_call operands and save one HBM round trip.
        x = x.reshape(G2, NB, NT, H, W).transpose(0, 1, 3, 2, 4)
        return x.reshape(G2, NB, H, LW)

    x1g = pack(img1)
    x2g = pack(img2)

    # Static banded matrices for the separable Gaussian (baked weights).
    g = _gaussian_1d(WS, SIGMA).astype(np.float32)
    A_H = np.zeros((Ho_pad, H), np.float32)
    for o in range(Ho):
        A_H[o, o:o + WS] = g
    A_H5 = np.kron(np.eye(FIVE, dtype=np.float32), A_H)       # (5*Ho_pad, 5*H)
    A_W = np.zeros((W, Wo), np.float32)
    for v in range(Wo):
        A_W[v:v + WS, v] = g
    A_Wbd = np.kron(np.eye(NT, dtype=np.float32), A_W)        # (LW, LWo)
    if LWo_pad != LWo:
        A_Wbd = np.pad(A_Wbd, ((0, 0), (0, LWo_pad - LWo)))   # zero pad cols -> lane-dense out

    c_arr = jnp.stack([c1, c2]).astype(jnp.float32)            # (C1, C2) -> SMEM

    # Cost estimate counts only the non-zero bands of the kron matrices.
    per_group_flops = (3 * H * LW
                       + 2 * FIVE * Ho_pad * H * LW
                       + 2 * FIVE * Ho_pad * W * Wo * NT
                       + 14 * Ho_pad * LWo_pad)
    flops = int(G2 * NB * per_group_flops)
    transcendentals = int(G2 * NB * Ho_pad * LWo_pad)
    bytes_accessed = int(4 * (2 * G2 * NB * H * LW + G2 * NB * LWo_pad
                              + A_H5.size + A_Wbd.size + 2))

    out = pl.pallas_call(
        _make_ssim_kernel(NB, Ho, Ho_pad, LWo_pad),
        out_shape=jax.ShapeDtypeStruct((G2, NB, LWo_pad), jnp.float32),
        grid=(G2,),
        in_specs=[
            pl.BlockSpec(memory_space=pltpu.MemorySpace.SMEM),                 # (C1, C2)
            pl.BlockSpec((FIVE * Ho_pad, FIVE * H), lambda i: (0, 0)),         # A_H5
            pl.BlockSpec((LW, LWo_pad), lambda i: (0, 0)),                     # A_Wbd
            pl.BlockSpec((pl.Squeezed(), NB, H, LW), lambda i: (i, 0, 0, 0)),  # x1 groups
            pl.BlockSpec((pl.Squeezed(), NB, H, LW), lambda i: (i, 0, 0, 0)),  # x2 groups
        ],
        out_specs=pl.BlockSpec((pl.Squeezed(), NB, LWo_pad), lambda i: (i, 0, 0)),
        compiler_params=pltpu.CompilerParams(
            dimension_semantics=("parallel",),
            vmem_limit_bytes=32 * 1024 * 1024,
        ),
        cost_estimate=pl.CostEstimate(
            flops=flops, transcendentals=transcendentals,
            bytes_accessed=bytes_accessed),
    )(c_arr, jnp.asarray(A_H5), jnp.asarray(A_Wbd), x1g, x2g)

    # out[g, nb, t*Wo + v] = per-column partial sums of plane ((g*NB+nb)*NT+t).
    per_plane = out[..., :LWo].reshape(G2 * NB * NT, Wo).sum(axis=-1)  # (N_pad,)
    total = jnp.sum(per_plane[:N])                 # drop zero-padded planes
    return total / float(N * Ho * Wo)


def ssim_forward(img1, img2):
    """Matches SSIM.forward(img1, img2) with size_average=True, val_range=None."""
    # Data-dependent dynamic range L (val_range=None path). max/min are
    # invariant to the permute/reshape, so they are computed on the raw input
    # and fed to the kernel through SMEM as C1/C2.
    max_val = jnp.where(jnp.max(img1) > 128.0, 255.0, 1.0)
    min_val = jnp.where(jnp.min(img1) < -0.5, -1.0, 0.0)
    L = max_val - min_val
    C1 = (0.01 * L) ** 2
    C2 = (0.03 * L) ** 2
    # TODO(synk): `cs = mean(v1/v2)` is computed in the torch code but discarded
    # (full=False); it is not reproduced here.
    return _pallas_ssim_core(img1, img2, C1, C2)


def ssim_reference_np(img1, img2):
    """Ground-truth reference in float64 numpy (matches the torch math)."""
    a = np.asarray(img1, np.float64)
    b = np.asarray(img2, np.float64)
    B, D1, D2, D3, D4 = a.shape
    x1 = a.transpose(0, 2, 3, 1, 4).reshape(B, D2, D3, D1 * D4)
    x2 = b.transpose(0, 2, 3, 1, 4).reshape(B, D2, D3, D1 * D4)
    max_val = 255.0 if x1.max() > 128 else 1.0
    min_val = -1.0 if x1.min() < -0.5 else 0.0
    L = max_val - min_val
    C1 = (0.01 * L) ** 2
    C2 = (0.03 * L) ** 2
    _, C, H, W = x1.shape
    WS = WINDOW_SIZE
    Ho, Wo = H - WS + 1, W - WS + 1
    win = _gaussian_window_2d(WS, SIGMA)
    xf1 = x1.reshape(-1, H, W)
    xf2 = x2.reshape(-1, H, W)

    def conv(x):
        out = np.zeros((x.shape[0], Ho, Wo), np.float64)
        for ki in range(WS):
            for kj in range(WS):
                out += win[ki, kj] * x[:, ki:ki + Ho, kj:kj + Wo]
        return out

    mu1, mu2 = conv(xf1), conv(xf2)
    mu1_sq, mu2_sq, mu1_mu2 = mu1 * mu1, mu2 * mu2, mu1 * mu2
    sigma1_sq = conv(xf1 * xf1) - mu1_sq
    sigma2_sq = conv(xf2 * xf2) - mu2_sq
    sigma12 = conv(xf1 * xf2) - mu1_mu2
    v1 = 2.0 * sigma12 + C2
    v2 = sigma1_sq + sigma2_sq + C2
    ssim_map = (2.0 * mu1_mu2 + C1) * v1 / ((mu1_sq + mu2_sq + C1) * v2)
    return np.float32(ssim_map.mean())


if __name__ == "__main__":
    key = jax.random.PRNGKey(0)
    k1, k2 = jax.random.split(key)
    # 5-D input as the torch module expects: (B, D1, D2, D3, D4)
    # -> NCHW = (2, 3, 16, 16) internally (C=3, H=16, W=4*4=16); conv needs H,W >= 11.
    shape = (2, 4, 3, 16, 4)
    img1 = jax.random.normal(k1, shape, dtype=jnp.float32)
    img2 = jax.random.normal(k2, shape, dtype=jnp.float32)

    out = jax.jit(ssim_forward)(img1, img2)
    out = jax.block_until_ready(out)

    ref = ssim_reference_np(np.asarray(img1), np.asarray(img2))
    # 2e-3 tolerance vs float64 ground truth: headroom for the MXU's default
    # (reduced-precision pass) f32 matmul and the approximate EUP reciprocal.
    np.testing.assert_allclose(np.asarray(out), ref, rtol=2e-3, atol=2e-3)
    print("KERNEL_OK")
</pallas_src>

<mosaic_0001>
module attributes {stable_mosaic.version = 11 : i64} {
  func.func @kernel(%arg0: i32, %arg1: memref<2xf32, #tpu.memory_space<smem>>, %arg2: memref<40x80xf32, #tpu.memory_space<vmem>>, %arg3: memref<96x128xf32, #tpu.memory_space<vmem>>, %arg4: memref<1x1x16x96xf32, #tpu.memory_space<vmem>>, %arg5: memref<1x1x16x96xf32, #tpu.memory_space<vmem>>, %arg6: memref<1x1x128xf32, #tpu.memory_space<vmem>>) attributes {dimension_semantics = [#tpu.dimension_semantics<parallel>], iteration_bounds = array<i64: 1>, scalar_prefetch = 0 : i64, scratch_operands = 0 : i64, tpu.core_type = #tpu.core_type<tc>, window_params = [{transform_indices = @transform_0, window_bounds = array<i64: 2>}, {pipeline_mode = #tpu.pipeline_mode<synchronous>, transform_indices = @transform_1, window_bounds = array<i64: 40, 80>}, {pipeline_mode = #tpu.pipeline_mode<synchronous>, transform_indices = @transform_2, window_bounds = array<i64: 96, 128>}, {transform_indices = @transform_3, window_bounds = array<i64: 1, 1, 16, 96>}, {transform_indices = @transform_4, window_bounds = array<i64: 1, 1, 16, 96>}, {transform_indices = @transform_5, window_bounds = array<i64: 1, 1, 128>}]} {
    %c0 = arith.constant 0 : index
    %0 = memref.load %arg1[%c0] : memref<2xf32, #tpu.memory_space<smem>>
    %c1 = arith.constant 1 : index
    %1 = memref.load %arg1[%c1] : memref<2xf32, #tpu.memory_space<smem>>
    %c0_0 = arith.constant 0 : index
    %c0_1 = arith.constant 0 : index
    %2 = vector.load %arg2[%c0_0, %c0_1] : memref<40x80xf32, #tpu.memory_space<vmem>>, vector<40x80xf32>
    %c0_2 = arith.constant 0 : index
    %c0_3 = arith.constant 0 : index
    %3 = vector.load %arg3[%c0_2, %c0_3] : memref<96x128xf32, #tpu.memory_space<vmem>>, vector<96x128xf32>
    %4 = tpu.iota {dimensions = array<i32: 0>} : vector<8x128xi32>
    %c6_i32 = arith.constant 6 : i32
    %5 = vector.broadcast %c6_i32 : i32 to vector<8x128xi32>
    %6 = arith.cmpi slt, %4, %5 : vector<8x128xi32>
    %7 = arith.extui %6 : vector<8x128xi1> to vector<8x128xi32>
    %8 = arith.sitofp %7 : vector<8x128xi32> to vector<8x128xf32>
    %c0_4 = arith.constant 0 : index
    %c0_5 = arith.constant 0 : index
    %c0_6 = arith.constant 0 : index
    %c0_7 = arith.constant 0 : index
    %9 = vector.load %arg4[%c0_4, %c0_5, %c0_6, %c0_7] : memref<1x1x16x96xf32, #tpu.memory_space<vmem>>, vector<1x1x16x96xf32>
    %10 = vector.shape_cast %9 : vector<1x1x16x96xf32> to vector<16x96xf32>
    %c0_8 = arith.constant 0 : index
    %c0_9 = arith.constant 0 : index
    %c0_10 = arith.constant 0 : index
    %c0_11 = arith.constant 0 : index
    %11 = vector.load %arg5[%c0_8, %c0_9, %c0_10, %c0_11] : memref<1x1x16x96xf32, #tpu.memory_space<vmem>>, vector<1x1x16x96xf32>
    %12 = vector.shape_cast %11 : vector<1x1x16x96xf32> to vector<16x96xf32>
    %13 = arith.mulf %10, %10 : vector<16x96xf32>
    %14 = arith.mulf %12, %12 : vector<16x96xf32>
    %15 = arith.mulf %10, %12 : vector<16x96xf32>
    %16 = tpu.concatenate %10, %12, %13, %14, %15 in 0 : vector<16x96xf32>, vector<16x96xf32>, vector<16x96xf32>, vector<16x96xf32>, vector<16x96xf32> -> vector<80x96xf32>
    %cst = arith.constant dense<0.000000e+00> : vector<40x96xf32>
    %17 = tpu.matmul %2, %16, %cst {dimension_numbers = #tpu.dot_dimension_numbers<[1], [0], [0], [1], [0, 0, 1, 1], [], []>} : vector<40x80xf32>, vector<80x96xf32>, vector<40x96xf32> -> vector<40x96xf32>
    %cst_12 = arith.constant dense<0.000000e+00> : vector<40x128xf32>
    %18 = tpu.matmul %17, %3, %cst_12 {dimension_numbers = #tpu.dot_dimension_numbers<[1], [0], [0], [1], [0, 0, 1, 1], [], []>} : vector<40x96xf32>, vector<96x128xf32>, vector<40x128xf32> -> vector<40x128xf32>
    %19 = vector.extract_strided_slice %18 {offsets = [0, 0], sizes = [8, 128], strides = [1, 1]} : vector<40x128xf32> to vector<8x128xf32>
    %20 = vector.extract_strided_slice %18 {offsets = [8, 0], sizes = [8, 128], strides = [1, 1]} : vector<40x128xf32> to vector<8x128xf32>
    %21 = vector.extract_strided_slice %18 {offsets = [16, 0], sizes = [8, 128], strides = [1, 1]} : vector<40x128xf32> to vector<8x128xf32>
    %22 = vector.extract_strided_slice %18 {offsets = [24, 0], sizes = [8, 128], strides = [1, 1]} : vector<40x128xf32> to vector<8x128xf32>
    %23 = vector.extract_strided_slice %18 {offsets = [32, 0], sizes = [8, 128], strides = [1, 1]} : vector<40x128xf32> to vector<8x128xf32>
    %24 = arith.mulf %19, %19 : vector<8x128xf32>
    %25 = arith.mulf %20, %20 : vector<8x128xf32>
    %26 = arith.mulf %19, %20 : vector<8x128xf32>
    %27 = arith.subf %21, %24 : vector<8x128xf32>
    %28 = arith.subf %22, %25 : vector<8x128xf32>
    %29 = arith.subf %23, %26 : vector<8x128xf32>
    %cst_13 = arith.constant 2.000000e+00 : f32
    %30 = vector.broadcast %cst_13 : f32 to vector<8x128xf32>
    %31 = arith.mulf %30, %29 : vector<8x128xf32>
    %32 = vector.broadcast %1 : f32 to vector<8x128xf32>
    %33 = arith.addf %31, %32 : vector<8x128xf32>
    %34 = arith.addf %27, %28 : vector<8x128xf32>
    %35 = vector.broadcast %1 : f32 to vector<8x128xf32>
    %36 = arith.addf %34, %35 : vector<8x128xf32>
    %cst_14 = arith.constant 2.000000e+00 : f32
    %37 = vector.broadcast %cst_14 : f32 to vector<8x128xf32>
    %38 = arith.mulf %37, %26 : vector<8x128xf32>
    %39 = vector.broadcast %0 : f32 to vector<8x128xf32>
    %40 = arith.addf %38, %39 : vector<8x128xf32>
    %41 = arith.mulf %40, %33 : vector<8x128xf32>
    %42 = arith.addf %24, %25 : vector<8x128xf32>
    %43 = vector.broadcast %0 : f32 to vector<8x128xf32>
    %44 = arith.addf %42, %43 : vector<8x128xf32>
    %45 = arith.mulf %44, %36 : vector<8x128xf32>
    %46 = tpu.reciprocal %45 {approx = true} : vector<8x128xf32> -> vector<8x128xf32>
    %47 = arith.mulf %41, %46 : vector<8x128xf32>
    %48 = arith.mulf %47, %8 : vector<8x128xf32>
    %cst_15 = arith.constant dense<0.000000e+00> : vector<128xf32>
    %49 = vector.multi_reduction <add>, %48, %cst_15 [0] : vector<8x128xf32> to vector<128xf32>
    %50 = vector.shape_cast %49 : vector<128xf32> to vector<1x128xf32>
    %c0_16 = arith.constant 0 : index
    %c0_17 = arith.constant 0 : index
    %c0_18 = arith.constant 0 : index
    %51 = vector.load %arg6[%c0_16, %c0_17, %c0_18] : memref<1x1x128xf32, #tpu.memory_space<vmem>>, vector<1x1x128xf32>
    %52 = vector.shape_cast %51 : vector<1x1x128xf32> to vector<1x128xf32>
    %53 = vector.shape_cast %50 : vector<1x128xf32> to vector<1x1x128xf32>
    tpu.vector_store %arg6[%c0_16, %c0_17, %c0_18], %53 {strides = array<i32>} : memref<1x1x128xf32, #tpu.memory_space<vmem>>, vector<1x1x128xf32>,
    return
  }
  func.func @transform_0(%arg0: i32) -> i32 {
    %c0_i32 = arith.constant 0 : i32
    %c0_i32_0 = arith.constant 0 : i32
    return %c0_i32 : i32
  }
  func.func @transform_1(%arg0: i32) -> (i32, i32) {
    %c0_i32 = arith.constant 0 : i32
    %c0_i32_0 = arith.constant 0 : i32
    %c0_i32_1 = arith.constant 0 : i32
    return %c0_i32, %c0_i32_0 : i32, i32
  }
  func.func @transform_2(%arg0: i32) -> (i32, i32) {
    %c0_i32 = arith.constant 0 : i32
    %c0_i32_0 = arith.constant 0 : i32
    %c0_i32_1 = arith.constant 0 : i32
    return %c0_i32, %c0_i32_0 : i32, i32
  }
  func.func @transform_3(%arg0: i32) -> (i32, i32, i32, i32) {
    %c0_i32 = arith.constant 0 : i32
    %c0_i32_0 = arith.constant 0 : i32
    %c0_i32_1 = arith.constant 0 : i32
    %c0_i32_2 = arith.constant 0 : i32
    return %arg0, %c0_i32, %c0_i32_0, %c0_i32_1 : i32, i32, i32, i32
  }
  func.func @transform_4(%arg0: i32) -> (i32, i32, i32, i32) {
    %c0_i32 = arith.constant 0 : i32
    %c0_i32_0 = arith.constant 0 : i32
    %c0_i32_1 = arith.constant 0 : i32
    %c0_i32_2 = arith.constant 0 : i32
    return %arg0, %c0_i32, %c0_i32_0, %c0_i32_1 : i32, i32, i32, i32
  }
  func.func @transform_5(%arg0: i32) -> (i32, i32, i32) {
    %c0_i32 = arith.constant 0 : i32
    %c0_i32_0 = arith.constant 0 : i32
    %c0_i32_1 = arith.constant 0 : i32
    return %arg0, %c0_i32, %c0_i32_0 : i32, i32, i32
  }
}

</mosaic_0001>

<llo_original>
// kernel: ssim_forward.1
$region0: #{ssim_forward.1}
  #allocation0 [shape = 'u32[]', space=smem, size = 0x4, offset = 0x4, fixed_abs, tag = 'smem constant byte address 0x4 - core index']
  #allocation1 [shape = 'u32[72,128]{1,0:T(1,128)}', space=vmem, size = 0x9000, scoped, tag = 'internal scratch']
  %s0 = inlined_call_operand.vmem [shape: f32[2], index: 0, kind: input, shape index: {}]
  %s1 = inlined_call_operand.vmem [shape: f32[40,80], index: 1, kind: input, shape index: {}]
  %s2 = inlined_call_operand.vmem [shape: f32[96,128], index: 2, kind: input, shape index: {}]
  %s3 = inlined_call_operand.vmem [shape: f32[1,1,16,96], index: 3, kind: input, shape index: {}]
  %s4 = inlined_call_operand.vmem [shape: f32[1,1,16,96], index: 4, kind: input, shape index: {}]
  %s5 = inlined_call_operand.vmem [shape: f32[1,1,128], index: 5, kind: output, shape index: {}]
  %s6 = sld [smem:[#allocation0]]
  $region34: #{ssim_forward.1} parent=0
    _
  %s8 = ssub.s32 1, %s6
  %s9 = scalar_select 0, %s8, %s6
  $region1: #{ssim_forward.1} parent=0
    #allocation2 [shape = 'u8[512]{0}', space=smem, size = 0x200, scoped, tag = 'input window, operand 0, single buffered']
    #allocation3 [shape = 's32[1]{0}', space=sflag, size = 0x4, scoped, tag = 'scoped memory for ssim_forward.1']
    %10 = vsyncpa [#allocation3], 0
    // Predicated region
    $region2: #{ssim_forward.1} parent=1 // pred_check
      _
    $region3: #{ssim_forward.1} parent=1 // pred_check_branch
      %12 = sbr.rel (0) target = $region5
    $region4: #{ssim_forward.1} parent=1 // pred_region
      %14 = vsyncadd [#allocation3], 0
      %s16 = sshll.u32 %s0, 4
      %s17 = int_to_ptr.vmem [resolvable:$true] %s16
      %19 = dma.vmem_to_smem %s17, 16, [#allocation2], [#allocation3]
    $region5: #{ssim_forward.1} parent=1 // pred_fallthru
      _
    // Predicated region
    $region6: #{ssim_forward.1} parent=1 // pred_check
      _
    $region7: #{ssim_forward.1} parent=1 // pred_check_branch
      %21 = sbr.rel (0) target = $region9
    $region8: #{ssim_forward.1} parent=1 // pred_region
      _
    $region9: #{ssim_forward.1} parent=1 // pred_fallthru
      _
    // Predicated region
    $region10: #{ssim_forward.1} parent=1 // pred_check
      _
    $region11: #{ssim_forward.1} parent=1 // pred_check_branch
      %23 = sbr.rel (0) target = $region13
    $region12: #{ssim_forward.1} parent=1 // pred_region
      _
    $region13: #{ssim_forward.1} parent=1 // pred_fallthru
      _
    // Predicated region
    $region14: #{ssim_forward.1} parent=1 // pred_check
      _
    $region15: #{ssim_forward.1} parent=1 // pred_check_branch
      %25 = sbr.rel (0) target = $region17
    $region16: #{ssim_forward.1} parent=1 // pred_region
      _
    $region17: #{ssim_forward.1} parent=1 // pred_fallthru
      _
    // Predicated region
    $region18: #{ssim_forward.1} parent=1 // pred_check
      _
    $region19: #{ssim_forward.1} parent=1 // pred_check_branch
      %27 = sbr.rel (0) target = $region21
    $region20: #{ssim_forward.1} parent=1 // pred_region
      _
    $region21: #{ssim_forward.1} parent=1 // pred_fallthru
      _
    // Predicated region
    $region22: #{ssim_forward.1} parent=1 // pred_check
      _
    $region23: #{ssim_forward.1} parent=1 // pred_check_branch
      %29 = sbr.rel (0) target = $region25
    $region24: #{ssim_forward.1} parent=1 // pred_region
      %31 = dma.done [#allocation3], 16
    $region25: #{ssim_forward.1} parent=1 // pred_fallthru
      _
    %32 = sfence
    %s33 = sld [smem:[#allocation2]]
    %s34 = sld [smem:[#allocation2 + $0x1]]
    %v35 = vld [vmem:[%s1] sm:$0xff]
    %v36 = vld [vmem:[%s1 + $0x8] sm:$0xff]
    %v37 = vld [vmem:[%s1 + $0x10] sm:$0xff]
    %v38 = vld [vmem:[%s1 + $0x18] sm:$0xff]
    %v39 = vld [vmem:[%s1 + $0x20] sm:$0xff]
    %v40 = vld [vmem:[%s2] sm:$0xff]
    %v41 = vld [vmem:[%s2 + $0x8] sm:$0xff]
    %v42 = vld [vmem:[%s2 + $0x10] sm:$0xff]
    %v43 = vld [vmem:[%s2 + $0x18] sm:$0xff]
    %v44 = vld [vmem:[%s2 + $0x20] sm:$0xff]
    %v45 = vld [vmem:[%s2 + $0x28] sm:$0xff]
    %v46 = vld [vmem:[%s2 + $0x30] sm:$0xff]
    %v47 = vld [vmem:[%s2 + $0x38] sm:$0xff]
    %v48 = vld [vmem:[%s2 + $0x40] sm:$0xff]
    %v49 = vld [vmem:[%s2 + $0x48] sm:$0xff]
    %v50 = vld [vmem:[%s2 + $0x50] sm:$0xff]
    %v51 = vld [vmem:[%s2 + $0x58] sm:$0xff]
    %v52 = vlaneseq
    %v53 = vshrl.u32 %v52, 7
    %vm54 = vcmp.lt.s32.totalorder %v53, 6
    %v55 = vsel %vm54, 1, 0
    %v56 = vcvt.s32.f32 %v55
    %v57 = vld [vmem:[%s3] sm:$0xff]
    %v58 = vld [vmem:[%s3 + $0x8] sm:$0xff]
    %v59 = vld [vmem:[%s4] sm:$0xff]
    %v60 = vld [vmem:[%s4 + $0x8] sm:$0xff]
    %v61 = vmul.f32 %v57, %v57
    %v62 = vmul.f32 %v58, %v58
    %v63 = vmul.f32 %v59, %v59
    %v64 = vmul.f32 %v60, %v60
    %v65 = vmul.f32 %v57, %v59
    %v66 = vmul.f32 %v58, %v60
    %vm67 = vcmask 654336
    %v69 = vsel %vm67, %v35, 0
    %v72 = vsel %vm67, %v36, 0
    %v75 = vsel %vm67, %v37, 0
    %v78 = vsel %vm67, %v38, 0
    %v81 = vsel %vm67, %v39, 0
    %83 = vmatpush.msra.mxu0 0.0
    %84 = vmatpush.msra.mxu0 0.0
    %85 = vmatpush.msra.mxu0 0.0
    %86 = vmatpush.msra.mxu0 0.0
    %87 = vmatpush.msra.mxu0 0.0
    %88 = vmatpush.msra.mxu0 0.0
    %89 = vmatpush.msra.mxu0 %v66
    %90 = vmatpush.msra.mxu0 %v65
    %91 = vmatpush.msra.mxu0 %v64
    %92 = vmatpush.msra.mxu0 %v63
    %93 = vmatpush.msra.mxu0 %v62
    %94 = vmatpush.msra.mxu0 %v61
    %95 = vmatpush.msra.mxu0 %v60
    %96 = vmatpush.msra.mxu0 %v59
    %97 = vmatpush.msra.mxu0 %v58
    %98 = vmatpush.msra.mxu0 %v57
    %99 = vmatmul.f32.gmra.mxu0 %v69
    %v100 = vpop.f32.mrf.mxu0
    %v101 = vadd.f32 0.0, %v100
    %102 = vmatmul.f32.gmra.mxu0 %v72
    %v103 = vpop.f32.mrf.mxu0
    %v104 = vadd.f32 0.0, %v103
    %105 = vmatmul.f32.gmra.mxu0 %v75
    %v106 = vpop.f32.mrf.mxu0
    %v107 = vadd.f32 0.0, %v106
    %108 = vmatmul.f32.gmra.mxu0 %v78
    %v109 = vpop.f32.mrf.mxu0
    %v110 = vadd.f32 0.0, %v109
    %111 = vmatmul.f32.gmra.mxu0 %v81
    %v112 = vpop.f32.mrf.mxu0
    %v113 = vadd.f32 0.0, %v112
    %114 = vdwg.mxu0
    %vm115 = vcmask 785408
    %v117 = vsel %vm115, %v101, 0
    %v120 = vsel %vm115, %v104, 0
    %v123 = vsel %vm115, %v107, 0
    %v126 = vsel %vm115, %v110, 0
    %v129 = vsel %vm115, %v113, 0
    %131 = vmatpush.msra.mxu0 0.0
    %132 = vmatpush.msra.mxu0 0.0
    %133 = vmatpush.msra.mxu0 0.0
    %134 = vmatpush.msra.mxu0 0.0
    %135 = vmatpush.msra.mxu0 %v51
    %136 = vmatpush.msra.mxu0 %v50
    %137 = vmatpush.msra.mxu0 %v49
    %138 = vmatpush.msra.mxu0 %v48
    %139 = vmatpush.msra.mxu0 %v47
    %140 = vmatpush.msra.mxu0 %v46
    %141 = vmatpush.msra.mxu0 %v45
    %142 = vmatpush.msra.mxu0 %v44
    %143 = vmatpush.msra.mxu0 %v43
    %144 = vmatpush.msra.mxu0 %v42
    %145 = vmatpush.msra.mxu0 %v41
    %146 = vmatpush.msra.mxu0 %v40
    %147 = vmatmul.f32.gmra.mxu0 %v117
    %v148 = vpop.f32.mrf.mxu0
    %v149 = vadd.f32 0.0, %v148
    %150 = vmatmul.f32.gmra.mxu0 %v120
    %v151 = vpop.f32.mrf.mxu0
    %v152 = vadd.f32 0.0, %v151
    %153 = vmatmul.f32.gmra.mxu0 %v123
    %v154 = vpop.f32.mrf.mxu0
    %v155 = vadd.f32 0.0, %v154
    %156 = vmatmul.f32.gmra.mxu0 %v126
    %v157 = vpop.f32.mrf.mxu0
    %v158 = vadd.f32 0.0, %v157
    %159 = vmatmul.f32.gmra.mxu0 %v129
    %v160 = vpop.f32.mrf.mxu0
    %v161 = vadd.f32 0.0, %v160
    %162 = vdwg.mxu0
    %v163 = vmul.f32 %v149, %v149
    %v164 = vmul.f32 %v152, %v152
    %v165 = vmul.f32 %v149, %v152
    %v166 = vsub.f32 %v155, %v163
    %v167 = vsub.f32 %v158, %v164
    %v168 = vsub.f32 %v161, %v165
    %v169 = vmul.f32 %v168, 2.0
    %v170 = vstv %s34
    %v171 = vadd.f32 %v169, %v170
    %v172 = vadd.f32 %v166, %v167
    %v173 = vadd.f32 %v172, %v170
    %v174 = vmul.f32 %v165, 2.0
    %v175 = vstv %s33
    %v176 = vadd.f32 %v174, %v175
    %v177 = vmul.f32 %v176, %v171
    %v178 = vadd.f32 %v163, %v164
    %v179 = vadd.f32 %v178, %v175
    %v180 = vmul.f32 %v179, %v173
    %v181 = vrcp.pop %v180
    %v182 = vmul.f32 %v177, %v181
    %v183 = vmul.f32 %v182, %v56
    %v184 = vrot.slane %v183, 4
    %v185 = vadd.f32 %v183, %v184
    %v186 = vrot.slane %v185, 2
    %v187 = vadd.f32 %v185, %v186
    %v188 = vrot.slane %v187, 1
    %v189 = vadd.f32 %v187, %v188
    %190 = vst [vmem:[%s5] sm:$0x1] %v189
    // Predicated region
    $region26: #{ssim_forward.1} parent=1 // pred_check
      _
    $region27: #{ssim_forward.1} parent=1 // pred_check_branch
      %192 = sbr.rel (0) target = $region29
    $region28: #{ssim_forward.1} parent=1 // pred_region
      _
    $region29: #{ssim_forward.1} parent=1 // pred_fallthru
      _
    // Predicated region
    $region30: #{ssim_forward.1} parent=1 // pred_check
      _
    $region31: #{ssim_forward.1} parent=1 // pred_check_branch
      %194 = sbr.rel (0) target = $region33
    $region32: #{ssim_forward.1} parent=1 // pred_region
      _
    $region33: #{ssim_forward.1} parent=1 // pred_fallthru
      _
    %195 = vsyncpa [#allocation3], 1

</llo_original>
